<compile_context>
chip_gen: v6e
topology: v6e:2x2x1
jax: 0.10.0
libtpu: 0.0.40
codegen_flags: <defaults>
</compile_context>

<pallas_src>
import functools

import jax
import jax.numpy as jnp
from jax.experimental import pallas as pl
from jax.experimental.pallas import tpu as pltpu


def _round_up(x, m):
    return ((x + m - 1) // m) * m


def rmsnorm_kernel(x_ref, w_ref, o_ref, *, eps, scale_in_f32):
    # x_ref: (TR, D) row tile, D on the 128-lane axis.
    x = x_ref[...]
    xf = x.astype(jnp.float32)
    ms = jnp.mean(xf * xf, axis=-1, keepdims=True)   # (TR, 1) cross-lane reduce (XLU)
    inv = jax.lax.rsqrt(ms + eps)                    # EUP rsqrt
    if scale_in_f32:
        # Weight pre-cast to f32 in the wrapper; full-precision scale.
        o_ref[...] = (xf * inv * w_ref[...]).astype(o_ref.dtype)
    else:
        # bf16 fast path (v6e/v7x): scale in the activation dtype, weight
        # pre-cast to that dtype; avoids keeping a full f32 tile live.
        o_ref[...] = (x * inv.astype(x.dtype) * w_ref[...]).astype(o_ref.dtype)


def rms_norm(x, weight, *, eps=1e-5, block_rows=None):
    """Pallas TPU RMSNorm over the last dim. Output dtype == input dtype."""
    orig_shape = x.shape
    d = orig_shape[-1]
    x2 = x.reshape(-1, d)                 # free, layout-preserving
    n = x2.shape[0]

    dtype_bytes = jnp.dtype(x2.dtype).itemsize
    sublane_mult = {4: 8, 2: 16, 1: 32}.get(dtype_bytes, 8)

    dev_kind = jax.devices()[0].device_kind.lower()
    is_v7 = "v7" in dev_kind
    # Scoped-VMEM budget per generation (v7x: 64 MiB/TC total -> stay ~40 MiB).
    vmem_budget = (40 if is_v7 else 96) * 1024 * 1024

    # ---- Row tile sized by bytes (~4 MiB input tile), sublane-rounded. ----
    row_bytes = max(d * dtype_bytes, 1)
    if block_rows is None:
        tr = max(sublane_mult, (4 << 20) // row_bytes)
    else:
        tr = max(sublane_mult, block_rows)
    tr = _round_up(tr, sublane_mult)
    tr = min(tr, _round_up(n, sublane_mult))          # never bigger than needed
    # Clamp so 2x(in+out) tiles (input dtype) + ~2x f32 temp tiles fit VMEM.
    per_row_bytes = 4 * row_bytes + 8 * d
    max_tr = max(sublane_mult,
                 ((vmem_budget - (8 << 20)) // per_row_bytes) // sublane_mult
                 * sublane_mult)
    tr = min(tr, max_tr)

    grid = (pl.cdiv(n, tr),)                          # ragged tail handled by Pallas

    # ---- Weight pre-cast once in the wrapper (no per-step astype). ----
    low_precision = x2.dtype in (jnp.bfloat16, jnp.float16)
    scale_in_f32 = not (low_precision and ("v6" in dev_kind or is_v7))
    w_dtype = jnp.float32 if scale_in_f32 else x2.dtype
    w2 = weight.astype(w_dtype).reshape(1, d)

    # ---- Explicit VMEM budget: real working set + margin, per generation. ----
    tile_bytes = tr * d * dtype_bytes
    working_set = 2 * (tile_bytes + tile_bytes) + 2 * tr * d * 4 \
        + d * jnp.dtype(w_dtype).itemsize
    vmem_bytes = int(min(vmem_budget, max(16 << 20, working_set + (4 << 20))))

    # ---- Advisory cost for XLA scheduling around the call. ----
    cost = pl.CostEstimate(
        flops=4 * n * d,
        transcendentals=n,
        bytes_accessed=2 * n * d * dtype_bytes + d * jnp.dtype(w_dtype).itemsize,
    )

    # v7x (2 TCs/chip): shard row tiles across cores; otherwise plain parallel.
    row_sem = getattr(pltpu, "CORE_PARALLEL", "parallel") if is_v7 else "parallel"

    kern = functools.partial(rmsnorm_kernel, eps=eps, scale_in_f32=scale_in_f32)
    out = pl.pallas_call(
        kern,
        out_shape=jax.ShapeDtypeStruct((n, d), x2.dtype),
        grid=grid,
        in_specs=[
            pl.BlockSpec((tr, d), lambda i: (i, 0)),   # x row tile (pipelined)
            pl.BlockSpec((1, d), lambda i: (0, 0)),    # weight, VMEM-resident
        ],
        out_specs=pl.BlockSpec((tr, d), lambda i: (i, 0)),
        compiler_params=pltpu.CompilerParams(
            dimension_semantics=(row_sem,),
            vmem_limit_bytes=vmem_bytes,
        ),
        cost_estimate=cost,
    )(x2, w2)

    return out.reshape(orig_shape)


def reference(x, weight, eps=1e-5):
    """Pure-JAX reference mirroring the PyTorch RMSNorm forward."""
    xf = x.astype(jnp.float32)
    ms = jnp.mean(xf * xf, axis=-1, keepdims=True)
    return xf * jax.lax.rsqrt(ms + eps) * weight.astype(jnp.float32)


if __name__ == "__main__":
    key = jax.random.PRNGKey(0)
    k_w, k_x, k_x2 = jax.random.split(key, 3)

    B, L, d_model = 2, 8, 32
    weight = 1.0 + 0.1 * jax.random.normal(k_w, (d_model,), dtype=jnp.float32)
    x = jax.random.normal(k_x, (B, L, d_model), dtype=jnp.float32)

    out = jax.block_until_ready(rms_norm(x, weight))
    ref = jax.block_until_ready(reference(x, weight))
    assert out.shape == x.shape and out.dtype == x.dtype
    assert jnp.allclose(out, ref, rtol=1e-4, atol=1e-4), (
        f"max abs err {jnp.max(jnp.abs(out - ref))}")

    # Row count not a multiple of 8 (exercises the ragged-last-block path;
    # no wrapper pad/slice any more).
    x_odd = jax.random.normal(k_x2, (3, 5, d_model), dtype=jnp.float32)
    out_odd = jax.block_until_ready(rms_norm(x_odd, weight))
    ref_odd = reference(x_odd, weight)
    assert jnp.allclose(out_odd, ref_odd, rtol=1e-4, atol=1e-4)

    # bf16 activations: output stays bf16; reduce/rsqrt in f32, scale either
    # in bf16 (v6e/v7x) or f32 (v5e / others).
    x_bf16 = x.astype(jnp.bfloat16)
    out_bf16 = jax.block_until_ready(rms_norm(x_bf16, weight))
    assert out_bf16.dtype == jnp.bfloat16
    ref_bf16 = reference(x_bf16.astype(jnp.float32), weight)
    assert jnp.allclose(out_bf16.astype(jnp.float32), ref_bf16,
                        rtol=5e-2, atol=5e-2)

    # Non-multiple-of-8 user block_rows is rounded instead of failing to lower.
    out_br = jax.block_until_ready(rms_norm(x, weight, block_rows=100))
    assert jnp.allclose(out_br, ref, rtol=1e-4, atol=1e-4)

    print("KERNEL_OK")
</pallas_src>

<mosaic_0001>
module attributes {stable_mosaic.version = 11 : i64} {
  func.func @rmsnorm_kernel(%arg0: i32, %arg1: memref<16x32xf32, #tpu.memory_space<vmem>>, %arg2: memref<1x32xf32, #tpu.memory_space<vmem>>, %arg3: memref<16x32xf32, #tpu.memory_space<vmem>>) attributes {dimension_semantics = [#tpu.dimension_semantics<parallel>], iteration_bounds = array<i64: 1>, scalar_prefetch = 0 : i64, scratch_operands = 0 : i64, tpu.core_type = #tpu.core_type<tc>, window_params = [{transform_indices = @transform_0, window_bounds = array<i64: 16, 32>}, {pipeline_mode = #tpu.pipeline_mode<synchronous>, transform_indices = @transform_1, window_bounds = array<i64: 1, 32>}, {transform_indices = @transform_2, window_bounds = array<i64: 16, 32>}]} {
    %c0 = arith.constant 0 : index
    %c0_0 = arith.constant 0 : index
    %0 = vector.load %arg1[%c0, %c0_0] : memref<16x32xf32, #tpu.memory_space<vmem>>, vector<16x32xf32>
    %1 = arith.mulf %0, %0 : vector<16x32xf32>
    %cst = arith.constant dense<0.000000e+00> : vector<16xf32>
    %2 = vector.multi_reduction <add>, %1, %cst [1] : vector<16x32xf32> to vector<16xf32>
    %3 = vector.shape_cast %2 : vector<16xf32> to vector<16x1xf32>
    %cst_1 = arith.constant 3.200000e+01 : f32
    %4 = vector.broadcast %cst_1 : f32 to vector<16x1xf32>
    %5 = arith.divf %3, %4 : vector<16x1xf32>
    %cst_2 = arith.constant 9.99999974E-6 : f32
    %6 = vector.broadcast %cst_2 : f32 to vector<16x1xf32>
    %7 = arith.addf %5, %6 : vector<16x1xf32>
    %8 = math.rsqrt %7 : vector<16x1xf32>
    %9 = vector.broadcast %8 : vector<16x1xf32> to vector<16x32xf32>
    %10 = arith.mulf %0, %9 : vector<16x32xf32>
    %c0_3 = arith.constant 0 : index
    %c0_4 = arith.constant 0 : index
    %11 = vector.load %arg2[%c0_3, %c0_4] : memref<1x32xf32, #tpu.memory_space<vmem>>, vector<1x32xf32>
    %12 = vector.broadcast %11 : vector<1x32xf32> to vector<16x32xf32>
    %13 = arith.mulf %10, %12 : vector<16x32xf32>
    %c0_5 = arith.constant 0 : index
    %c0_6 = arith.constant 0 : index
    %14 = vector.load %arg3[%c0_5, %c0_6] : memref<16x32xf32, #tpu.memory_space<vmem>>, vector<16x32xf32>
    tpu.vector_store %arg3[%c0_5, %c0_6], %13 {strides = array<i32>} : memref<16x32xf32, #tpu.memory_space<vmem>>, vector<16x32xf32>,
    return
  }
  func.func @transform_0(%arg0: i32) -> (i32, i32) {
    %c0_i32 = arith.constant 0 : i32
    %c0_i32_0 = arith.constant 0 : i32
    return %arg0, %c0_i32 : i32, i32
  }
  func.func @transform_1(%arg0: i32) -> (i32, i32) {
    %c0_i32 = arith.constant 0 : i32
    %c0_i32_0 = arith.constant 0 : i32
    %c0_i32_1 = arith.constant 0 : i32
    return %c0_i32, %c0_i32_0 : i32, i32
  }
  func.func @transform_2(%arg0: i32) -> (i32, i32) {
    %c0_i32 = arith.constant 0 : i32
    %c0_i32_0 = arith.constant 0 : i32
    return %arg0, %c0_i32 : i32, i32
  }
}

</mosaic_0001>

<llo_original>
// kernel: tpu_custom_call.1
$region0: #{tpu_custom_call.1}
  #allocation0 [shape = 'u32[]', space=smem, size = 0x4, offset = 0x4, fixed_abs, tag = 'smem constant byte address 0x4 - core index']
  #allocation1 [shape = 'u32[144,128]{1,0:T(1,128)}', space=vmem, size = 0x12000, scoped, tag = 'internal scratch']
  %s0 = inlined_call_operand.hbm [shape: f32[16,32], index: 0, kind: input, shape index: {}]
  %s1 = inlined_call_operand.vmem [shape: f32[1,32], index: 1, kind: input, shape index: {}]
  %s2 = inlined_call_operand.hbm [shape: f32[16,32], index: 2, kind: output, shape index: {}]
  %s3 = sld [smem:[#allocation0]]
  $region22: #{tpu_custom_call.1} parent=0
    _
  %s5 = ssub.s32 1, %s3
  %s6 = scalar_select 0, %s5, %s3
  $region1: #{tpu_custom_call.1} parent=0
    #allocation2 [shape = 'u8[8192]{0}', space=vmem, size = 0x2000, scoped, tag = 'input window, operand 0, single buffered']
    #allocation3 [shape = 's32[1]{0}', space=sflag, size = 0x4, scoped, tag = 'scoped memory for tpu_custom_call.1']
    #allocation4 [shape = 's32[1]{0}', space=sflag, size = 0x4, scoped, tag = 'scoped memory for tpu_custom_call.1']
    #allocation5 [shape = 'u8[8192]{0}', space=vmem, size = 0x2000, scoped, tag = 'output window, operand 0, single buffered']
    %7 = vsyncpa [#allocation3], 0
    %8 = vsyncpa [#allocation4], 0
    // Predicated region
    $region2: #{tpu_custom_call.1} parent=1 // pred_check
      _
    $region3: #{tpu_custom_call.1} parent=1 // pred_check_branch
      %10 = sbr.rel (0) target = $region5
    $region4: #{tpu_custom_call.1} parent=1 // pred_region
      %s12 = ssub.s32 256, 256
      %13 = vsyncadd [#allocation3], %s12
      %s14 = sshll.u32 [#allocation2], 4
      %s15 = int_to_ptr.vmem [resolvable:$true] %s14
      %20 = dma.hbm_to_vmem [thread:$0]  %s0, 256, %s15, [#allocation3], 128, 128, 8
    $region5: #{tpu_custom_call.1} parent=1 // pred_fallthru
      _
    // Predicated region
    $region6: #{tpu_custom_call.1} parent=1 // pred_check
      _
    $region7: #{tpu_custom_call.1} parent=1 // pred_check_branch
      %22 = sbr.rel (0) target = $region9
    $region8: #{tpu_custom_call.1} parent=1 // pred_region
      _
    $region9: #{tpu_custom_call.1} parent=1 // pred_fallthru
      _
    // Predicated region
    $region10: #{tpu_custom_call.1} parent=1 // pred_check
      _
    $region11: #{tpu_custom_call.1} parent=1 // pred_check_branch
      %24 = sbr.rel (0) target = $region13
    $region12: #{tpu_custom_call.1} parent=1 // pred_region
      %25 = dma.done [#allocation3], 256
    $region13: #{tpu_custom_call.1} parent=1 // pred_fallthru
      _
    %v26 = vld [vmem:[#allocation2] sm:$0xff]
    %v27 = vld [vmem:[#allocation2 + $0x8] sm:$0xff]
    %v28 = vmul.f32 %v26, %v26
    %v29 = vmul.f32 %v27, %v27
    %vm30 = vcmask 261120
    %v31 = vsel %vm30, %v28, 0.0
    %32 = vadd.xlane.f32.xlu0 %v31
    %v33 = vpop.xlane.xlu0 %32
    %v34 = vsel %vm30, %v29, 0.0
    %35 = vadd.xlane.f32.xlu0 %v34
    %v36 = vpop.xlane.xlu0 %35
    %v37 = vrcp.pop 32.0
    %v38 = vmul.f32 %v33, %v37
    %v39 = vmul.f32 %v36, %v37
    %v40 = vadd.f32 %v38, 1e-05
    %v41 = vadd.f32 %v39, 1e-05
    %v42 = vrsqrt.pop %v40
    %v43 = vrsqrt.pop %v41
    %v44 = vmul.f32 %v26, %v42
    %v45 = vmul.f32 %v27, %v43
    %v46 = vld [vmem:[%s1] sm:$0x1]
    %v48 = vlaneseq
    %v49 = vshrl.u32 %v48, 7
    %v50 = vsub.s32 0, %v49
    %v51 = vrot.slane %v46, %v50
    %v53 = vmul.f32 %v44, %v51
    %v54 = vmul.f32 %v45, %v51
    %55 = vst.msk [vmem:[#allocation5] sm:$0xff] %vm30, %v53
    %56 = vst.msk [vmem:[#allocation5 + $0x8] sm:$0xff] %vm30, %v54
    // Predicated region
    $region14: #{tpu_custom_call.1} parent=1 // pred_check
      _
    $region15: #{tpu_custom_call.1} parent=1 // pred_check_branch
      %58 = sbr.rel (0) target = $region17
    $region16: #{tpu_custom_call.1} parent=1 // pred_region
      %s60 = ssub.s32 256, 256
      %61 = vsyncadd [#allocation4], %s60
      %s62 = sshll.u32 [#allocation5], 4
      %s63 = int_to_ptr.vmem [resolvable:$true] %s62
      %68 = dma.vmem_to_hbm [thread:$0]  %s63, 256, %s2, [#allocation4], 128, 128, 8
    $region17: #{tpu_custom_call.1} parent=1 // pred_fallthru
      _
    // Predicated region
    $region18: #{tpu_custom_call.1} parent=1 // pred_check
      _
    $region19: #{tpu_custom_call.1} parent=1 // pred_check_branch
      %70 = sbr.rel (0) target = $region21
    $region20: #{tpu_custom_call.1} parent=1 // pred_region
      %71 = dma.done [#allocation4], 256
    $region21: #{tpu_custom_call.1} parent=1 // pred_fallthru
      _
    %72 = vsyncpa [#allocation3], 1
    %73 = vsyncpa [#allocation4], 1

</llo_original>
